<compile_context>
chip_gen: v7x
topology: tpu7x:2x2x1
jax: 0.10.0
libtpu: 0.0.40
codegen_flags: <defaults>
</compile_context>

<pallas_src>
import jax
import jax.numpy as jnp
from jax.experimental import pallas as pl
from jax.experimental.pallas import tpu as pltpu


# ---------------------------------------------------------------------------
# Kernel (shared by both paths)
# ---------------------------------------------------------------------------

def _add_pe_kernel(x_ref, pe_ref, o_ref):
    # x_ref/o_ref: (kb, T, D) or (1, tT, D); pe_ref: (1, T, D) or (1, tT, D).
    # pe broadcasts over the leading (batch) dim; jnp promotes dtypes like
    # torch (bf16 + f32 -> f32). astype is a no-op when dtypes already match.
    o_ref[...] = (x_ref[...] + pe_ref[...]).astype(o_ref.dtype)


# ---------------------------------------------------------------------------
# Generation-dependent budgets
# ---------------------------------------------------------------------------

_PE_RESIDENT_LIMIT = 4 * 2**20   # keep the whole PE table VMEM-resident below this


def _tpu_budgets():
    """Returns (target_tile_bytes, scoped_vmem_cap_bytes) for this TPU generation."""
    try:
        vmem_cap = int(pltpu.get_tpu_info().vmem_capacity_bytes)
    except Exception:  # not on TPU at trace time / API unavailable
        vmem_cap = 128 * 2**20
    if vmem_cap <= 64 * 2**20:
        # v7x-class: 64 MiB physical VMEM, ~3.2 TB/s HBM -> bigger steps matter
        # but the scoped request must stay well under physical capacity.
        return 6 * 2**20, 48 * 2**20
    # v5e / v6e: 128 MiB physical VMEM -> allow a big double-buffered working set.
    return 8 * 2**20, 100 * 2**20


# ---------------------------------------------------------------------------
# Wrapper
# ---------------------------------------------------------------------------

def abs_positional_encoding_1d(x, abs_pos_enc):
    """x: (B, T, D); abs_pos_enc: (1, T, D). Returns x + PE broadcast over batch."""
    B, T, D = x.shape
    assert abs_pos_enc.shape == (1, T, D)

    out_dtype = jnp.result_type(x.dtype, abs_pos_enc.dtype)
    x_item = jnp.dtype(x.dtype).itemsize
    pe_item = jnp.dtype(abs_pos_enc.dtype).itemsize
    out_item = jnp.dtype(out_dtype).itemsize

    target_tile, vmem_cap = _tpu_budgets()
    pe_bytes = T * D * pe_item
    headroom = 4 * 2**20

    if pe_bytes <= _PE_RESIDENT_LIMIT:
        # --- Path A: whole-batch-element blocks, PE table resident in VMEM ---
        per_batch_bytes = T * D * max(x_item, out_item)
        kb = max(1, min(B, target_tile // max(1, per_batch_bytes)))
        # Keep >= ~4 grid steps so both v7x TensorCores get work and the
        # DMA/compute pipeline actually overlaps (avoid a grid of (1,)).
        kb = min(kb, max(1, B // 4))

        def _need_a(k):
            # x + out double-buffered, PE (conservatively) double-buffered.
            return 2 * k * T * D * (x_item + out_item) + 2 * pe_bytes + headroom

        while kb > 1 and _need_a(kb) > vmem_cap:
            kb -= 1
        # Prefer kb | B: avoids a padded partial last block (wasted HBM writes).
        while B % kb:
            kb -= 1

        grid = (B // kb,)
        vmem_limit = int(min(vmem_cap, max(32 * 2**20, _need_a(kb))))

        return pl.pallas_call(
            _add_pe_kernel,
            out_shape=jax.ShapeDtypeStruct((B, T, D), out_dtype),
            grid=grid,
            in_specs=[
                pl.BlockSpec((kb, T, D), lambda i: (i, 0, 0)),
                pl.BlockSpec((1, T, D), lambda i: (0, 0, 0)),   # constant -> fetched once
            ],
            out_specs=pl.BlockSpec((kb, T, D), lambda i: (i, 0, 0)),
            compiler_params=pltpu.CompilerParams(
                dimension_semantics=("parallel",),
                vmem_limit_bytes=vmem_limit,
            ),
        )(x, abs_pos_enc)

    # --- Path B: PE too big to keep resident -> tile the token axis ---
    # Block second-to-last dim must be a multiple of the packed-dtype sublane
    # count (or equal full T); Pallas masks the ragged last tile itself, so we
    # never need a full-extent fallback.
    sublane = {4: 8, 2: 16, 1: 32}.get(x_item, 8)
    tT = max(sublane, (target_tile // max(1, D * x_item)) // sublane * sublane)

    def _need_b(t):
        return 2 * t * D * (x_item + pe_item + out_item) + headroom

    while tT > sublane and _need_b(tT) > vmem_cap:
        tT = max(sublane, (tT // 2) // sublane * sublane)
    if tT >= T:
        tT = T   # full extent is always a legal block shape

    # Token tiles OUTER, batch INNER: the PE block index depends only on t, so
    # it is NOT re-DMA'd across the B consecutive inner steps.
    grid = (pl.cdiv(T, tT), B)
    vmem_limit = int(min(vmem_cap, max(32 * 2**20, _need_b(tT))))

    return pl.pallas_call(
        _add_pe_kernel,
        out_shape=jax.ShapeDtypeStruct((B, T, D), out_dtype),
        grid=grid,
        in_specs=[
            pl.BlockSpec((1, tT, D), lambda t, b: (b, t, 0)),
            pl.BlockSpec((1, tT, D), lambda t, b: (0, t, 0)),   # broadcast PE over batch
        ],
        out_specs=pl.BlockSpec((1, tT, D), lambda t, b: (b, t, 0)),
        compiler_params=pltpu.CompilerParams(
            dimension_semantics=("parallel", "parallel"),
            vmem_limit_bytes=vmem_limit,
        ),
    )(x, abs_pos_enc)


if __name__ == "__main__":
    # Module config: tokens=8, dim=128 (lane-aligned), batch=2 — small demo shapes.
    tokens, dim = 8, 128
    batch = 2

    key = jax.random.PRNGKey(0)
    k_x, k_pe = jax.random.split(key)

    # Stand-in for nn.Parameter(torch.randn(1, tokens, dim))
    abs_pos_enc = jax.random.normal(k_pe, (1, tokens, dim), dtype=jnp.float32)
    x = jax.random.normal(k_x, (batch, tokens, dim), dtype=jnp.float32)

    # Pure-JAX reference of the PyTorch forward.
    ref = x + jnp.broadcast_to(abs_pos_enc, (batch, tokens, dim))

    out = abs_positional_encoding_1d(x, abs_pos_enc)
    out = jax.block_until_ready(out)

    assert out.shape == (batch, tokens, dim)
    assert out.dtype == ref.dtype
    assert jnp.allclose(out, ref, atol=1e-6), "mismatch vs reference"

    print("KERNEL_OK")
</pallas_src>

<mosaic_0001>
module attributes {stable_mosaic.version = 11 : i64} {
  func.func @_add_pe_kernel(%arg0: i32, %arg1: memref<1x8x128xf32, #tpu.memory_space<vmem>>, %arg2: memref<1x8x128xf32, #tpu.memory_space<vmem>>, %arg3: memref<1x8x128xf32, #tpu.memory_space<vmem>>) attributes {dimension_semantics = [#tpu.dimension_semantics<parallel>], iteration_bounds = array<i64: 2>, scalar_prefetch = 0 : i64, scratch_operands = 0 : i64, tpu.core_type = #tpu.core_type<tc>, window_params = [{transform_indices = @transform_0, window_bounds = array<i64: 1, 8, 128>}, {pipeline_mode = #tpu.pipeline_mode<synchronous>, transform_indices = @transform_1, window_bounds = array<i64: 1, 8, 128>}, {transform_indices = @transform_2, window_bounds = array<i64: 1, 8, 128>}]} {
    %c0 = arith.constant 0 : index
    %c0_0 = arith.constant 0 : index
    %c0_1 = arith.constant 0 : index
    %0 = vector.load %arg1[%c0, %c0_0, %c0_1] : memref<1x8x128xf32, #tpu.memory_space<vmem>>, vector<1x8x128xf32>
    %c0_2 = arith.constant 0 : index
    %c0_3 = arith.constant 0 : index
    %c0_4 = arith.constant 0 : index
    %1 = vector.load %arg2[%c0_2, %c0_3, %c0_4] : memref<1x8x128xf32, #tpu.memory_space<vmem>>, vector<1x8x128xf32>
    %2 = arith.addf %0, %1 : vector<1x8x128xf32>
    %c0_5 = arith.constant 0 : index
    %c0_6 = arith.constant 0 : index
    %c0_7 = arith.constant 0 : index
    %3 = vector.load %arg3[%c0_5, %c0_6, %c0_7] : memref<1x8x128xf32, #tpu.memory_space<vmem>>, vector<1x8x128xf32>
    tpu.vector_store %arg3[%c0_5, %c0_6, %c0_7], %2 {strides = array<i32>} : memref<1x8x128xf32, #tpu.memory_space<vmem>>, vector<1x8x128xf32>,
    return
  }
  func.func @transform_0(%arg0: i32) -> (i32, i32, i32) {
    %c0_i32 = arith.constant 0 : i32
    %c0_i32_0 = arith.constant 0 : i32
    %c0_i32_1 = arith.constant 0 : i32
    return %arg0, %c0_i32, %c0_i32_0 : i32, i32, i32
  }
  func.func @transform_1(%arg0: i32) -> (i32, i32, i32) {
    %c0_i32 = arith.constant 0 : i32
    %c0_i32_0 = arith.constant 0 : i32
    %c0_i32_1 = arith.constant 0 : i32
    %c0_i32_2 = arith.constant 0 : i32
    return %c0_i32, %c0_i32_0, %c0_i32_1 : i32, i32, i32
  }
  func.func @transform_2(%arg0: i32) -> (i32, i32, i32) {
    %c0_i32 = arith.constant 0 : i32
    %c0_i32_0 = arith.constant 0 : i32
    %c0_i32_1 = arith.constant 0 : i32
    return %arg0, %c0_i32, %c0_i32_0 : i32, i32, i32
  }
}

</mosaic_0001>

<llo_original>
// kernel: tpu_custom_call.1
$region0: #{tpu_custom_call.1}
  #allocation0 [shape = 'u32[]', space=smem, size = 0x4, offset = 0x4, fixed_abs, tag = 'smem constant byte address 0x4 - core index']
  #allocation1 [shape = 'u32[144,128]{1,0:T(1,128)}', space=vmem, size = 0x12000, scoped, tag = 'internal scratch']
  %s0 = inlined_call_operand.hbm [shape: f32[2,8,128], index: 0, kind: input, shape index: {}]
  %s1 = inlined_call_operand.hbm [shape: f32[1,8,128], index: 1, kind: input, shape index: {}]
  %s2 = inlined_call_operand.hbm [shape: f32[2,8,128], index: 2, kind: output, shape index: {}]
  %s3 = sld [smem:[#allocation0]]
  $region49: #{tpu_custom_call.1} parent=0
    _
  %s5 = ssub.s32 1, %s3
  %s6 = scalar_select 0, %s5, %s3
  $region1: #{tpu_custom_call.1} parent=0
    #allocation2 [shape = 'u8[8192]{0}', space=vmem, size = 0x2000, scoped, tag = 'input window, operand 0']
    #allocation3 [shape = 's32[2]{0}', space=sflag, size = 0x8, scoped, tag = 'scoped memory for tpu_custom_call.1']
    #allocation4 [shape = 's32[2]{0}', space=sflag, size = 0x8, scoped, tag = 'scoped memory for tpu_custom_call.1']
    #allocation5 [shape = 'u8[4096]{0}', space=vmem, size = 0x1000, scoped, tag = 'input window, operand 1, single buffered']
    #allocation6 [shape = 's32[1]{0}', space=sflag, size = 0x4, scoped, tag = 'scoped memory for tpu_custom_call.1']
    #allocation7 [shape = 'u8[8192]{0}', space=vmem, size = 0x2000, scoped, tag = 'output window, operand 0']
    %7 = vsyncpa [#allocation3], 0
    %s8 = scalar_lea.sflag [#allocation3], 1
    %9 = vsyncpa %s8, 0
    %10 = vsyncpa [#allocation6], 0
    %11 = vsyncpa [#allocation4], 0
    %s12 = scalar_lea.sflag [#allocation4], 1
    %13 = vsyncpa %s12, 0
    loop: start=0, step=1, limit=4
    $region2: #{tpu_custom_call.1} parent=1 // loop_pre_header
      _
    $region3: #{tpu_custom_call.1} parent=1 // loop_header
      %s15 = sphi 0, %s19
      %p16 = scmp.ge.s32.totalorder %s15, 4
      %s25 = sphi 0, %s27
      %s28 = sphi 0, %s25
      %s29 = sphi 0, %s28
      %s45 = sphi 0, %s29
      %s49 = sphi 0, %s49
      %s51 = sphi 0, %s49
      %s52 = sphi 0, %s51
      %s66 = sphi 0, %s52
      %s72 = sphi 0, %s74
      %s75 = sphi 0, %s72
      %s76 = sphi 0, %s75
      %s92 = sphi 0, %s76
    $region4: #{tpu_custom_call.1} parent=1 // loop_header_branch
      %18 = sbr.rel (%p16) target = $region8
    $region5: #{tpu_custom_call.1} parent=1 // loop_body
      %s20 = ssub.s32 %s15, 1
      %s21 = ssub.s32 %s15, 2
      %s22 = sadd.s32 %s15, 1
      %s23 = ssub.s32 %s15, %s22
      %p24 = scmp.eq.s32.totalorder %s23, 0
      %s26 = sadd.s32 %s25, 1
      %s27 = scalar_select %p24, %s25, %s26
      %p30 = pneg %p24
      %p31 = scmp.eq.s32.totalorder %s15, 1
      %p32 = por %p30, %p31
      %p33 = scmp.ne.s32.totalorder %s25, %s28
      %p34 = scmp.eq.s32.totalorder %s15, 0
      %p35 = por %p33, %p34
      %p36 = scmp.ne.s32.totalorder %s25, %s28
      %p37 = scmp.eq.s32.totalorder %s20, 1
      %p38 = por %p36, %p37
      %p39 = scmp.ne.s32.totalorder %s28, %s29
      %p40 = scmp.eq.s32.totalorder %s20, 0
      %p41 = por %p39, %p40
      %p42 = scmp.ne.s32.totalorder %s28, %s29
      %p43 = scmp.eq.s32.totalorder %s21, 1
      %p44 = por %p42, %p43
      %p46 = scmp.ne.s32.totalorder %s29, %s45
      %p47 = scmp.eq.s32.totalorder %s21, 0
      %p48 = por %p46, %p47
      %s50 = sadd.s32 %s49, 1
      %p53 = scmp.eq.s32.totalorder %s15, 1
      %p54 = scmp.ne.s32.totalorder %s49, %s51
      %p55 = scmp.eq.s32.totalorder %s15, 0
      %p56 = por %p54, %p55
      %p57 = scmp.ne.s32.totalorder %s49, %s51
      %p58 = scmp.eq.s32.totalorder %s20, 1
      %p59 = por %p57, %p58
      %p60 = scmp.ne.s32.totalorder %s51, %s52
      %p61 = scmp.eq.s32.totalorder %s20, 0
      %p62 = por %p60, %p61
      %p63 = scmp.ne.s32.totalorder %s51, %s52
      %p64 = scmp.eq.s32.totalorder %s21, 1
      %p65 = por %p63, %p64
      %p67 = scmp.ne.s32.totalorder %s52, %s66
      %p68 = scmp.eq.s32.totalorder %s21, 0
      %p69 = por %p67, %p68
      %s70 = ssub.s32 %s15, %s22
      %p71 = scmp.eq.s32.totalorder %s70, 0
      %s73 = sadd.s32 %s72, 1
      %s74 = scalar_select %p71, %s72, %s73
      %p77 = pneg %p71
      %p78 = scmp.eq.s32.totalorder %s15, 1
      %p79 = por %p77, %p78
      %p80 = scmp.ne.s32.totalorder %s72, %s75
      %p81 = scmp.eq.s32.totalorder %s15, 0
      %p82 = por %p80, %p81
      %p83 = scmp.ne.s32.totalorder %s72, %s75
      %p84 = scmp.eq.s32.totalorder %s20, 1
      %p85 = por %p83, %p84
      %p86 = scmp.ne.s32.totalorder %s75, %s76
      %p87 = scmp.eq.s32.totalorder %s20, 0
      %p88 = por %p86, %p87
      %p89 = scmp.ne.s32.totalorder %s75, %s76
      %p90 = scmp.eq.s32.totalorder %s21, 1
      %p91 = por %p89, %p90
      %p93 = scmp.ne.s32.totalorder %s76, %s92
      %p94 = scmp.eq.s32.totalorder %s21, 0
      %p95 = por %p93, %p94
      %p96 = scmp.le.s32.totalorder 1, %s15
      %p97 = scmp.lt.s32.totalorder %s15, 3
      %p98 = pnand %p96, %p97
      %p99 = pneg %p98
      // Predicated region
      $region9: #{tpu_custom_call.1} parent=5 // pred_check
        _
      $region10: #{tpu_custom_call.1} parent=5 // pred_check_branch
        %101 = sbr.rel (%p98) target = $region12
      $region11: #{tpu_custom_call.1} parent=5 // pred_region
        %s102 = ssub.s32 %s15, 1
        // Predicated region
        $region13: #{tpu_custom_call.1} parent=11 // pred_check
          %p103 = pneg %p62
        $region14: #{tpu_custom_call.1} parent=11 // pred_check_branch
          %105 = sbr.rel (%p103) target = $region16
        $region15: #{tpu_custom_call.1} parent=11 // pred_region
          %s107 = ssub.s32 128, 128
          %108 = vsyncadd [#allocation6], %s107
          %s110 = sshll.u32 [#allocation5], 4
          %s111 = int_to_ptr.vmem [resolvable:$true] %s110
          %113 = dma.hbm_to_vmem [thread:$0]  %s1, 128, %s111, [#allocation6]
        $region16: #{tpu_custom_call.1} parent=11 // pred_fallthru
          _
      $region12: #{tpu_custom_call.1} parent=5 // pred_fallthru
        _
      %p114 = scmp.lt.s32.totalorder %s15, 2
      // Predicated region
      $region17: #{tpu_custom_call.1} parent=5 // pred_check
        %p115 = pneg %p114
      $region18: #{tpu_custom_call.1} parent=5 // pred_check_branch
        %117 = sbr.rel (%p115) target = $region20
      $region19: #{tpu_custom_call.1} parent=5 // pred_region
        // Predicated region
        $region21: #{tpu_custom_call.1} parent=19 // pred_check
          %p118 = pneg %p35
        $region22: #{tpu_custom_call.1} parent=19 // pred_check_branch
          %120 = sbr.rel (%p118) target = $region24
        $region23: #{tpu_custom_call.1} parent=19 // pred_region
          %s121 = sand.u32 %s25, 1
          %s122 = scalar_lea.sflag [#allocation3], %s121
          %s123 = sand.u32 %s25, 1
          %s124 = smul.addr %s123, 8
          %s125 = scalar_lea.vmem [#allocation2], %s124
          %s127 = ssub.s32 128, 128
          %128 = vsyncadd %s122, %s127
          %s129 = smul.addr %s15, 128
          %s130 = scalar_lea.hbm %s0, %s129
          %s132 = sshll.u32 %s125, 4
          %s133 = int_to_ptr.vmem [resolvable:$true] %s132
          %135 = dma.hbm_to_vmem [thread:$0]  %s130, 128, %s133, %s122
        $region24: #{tpu_custom_call.1} parent=19 // pred_fallthru
          _
      $region20: #{tpu_custom_call.1} parent=5 // pred_fallthru
        _
      %p136 = scmp.le.s32.totalorder 1, %s15
      %p137 = scmp.lt.s32.totalorder %s15, 3
      %p138 = pnand %p136, %p137
      %p139 = pneg %p138
      // Predicated region
      $region25: #{tpu_custom_call.1} parent=5 // pred_check
        _
      $region26: #{tpu_custom_call.1} parent=5 // pred_check_branch
        %141 = sbr.rel (%p138) target = $region28
      $region27: #{tpu_custom_call.1} parent=5 // pred_region
        %s142 = ssub.s32 %s15, 1
        %s143 = sand.u32 %s28, 1
        %s144 = scalar_lea.sflag [#allocation3], %s143
        %s145 = sand.u32 %s28, 1
        %s146 = smul.addr %s145, 8
        %s147 = scalar_lea.vmem [#allocation2], %s146
        // Predicated region
        $region29: #{tpu_custom_call.1} parent=27 // pred_check
          %p148 = pneg %p41
        $region30: #{tpu_custom_call.1} parent=27 // pred_check_branch
          %150 = sbr.rel (%p148) target = $region32
        $region31: #{tpu_custom_call.1} parent=27 // pred_region
          %151 = dma.done %s144, 128
        $region32: #{tpu_custom_call.1} parent=27 // pred_fallthru
          _
        // Predicated region
        $region33: #{tpu_custom_call.1} parent=27 // pred_check
          %p152 = pneg %p62
        $region34: #{tpu_custom_call.1} parent=27 // pred_check_branch
          %154 = sbr.rel (%p152) target = $region36
        $region35: #{tpu_custom_call.1} parent=27 // pred_region
          %155 = dma.done [#allocation6], 128
        $region36: #{tpu_custom_call.1} parent=27 // pred_fallthru
          _
        %s156 = sand.u32 %s28, 1
        %s157 = scalar_lea.sflag [#allocation3], %s156
        %s158 = sand.u32 %s28, 1
        %s159 = smul.addr %s158, 8
        %s160 = scalar_lea.vmem [#allocation2], %s159
        %p161 = pneg %p41
        %p162 = pneg %p38
        %p163 = pneg %p62
        %p164 = pneg %p59
        %p165 = pneg %p88
        %p166 = pneg %p85
        %s167 = sand.u32 %s75, 1
        %s168 = scalar_lea.sflag [#allocation4], %s167
        %s169 = sand.u32 %s75, 1
        %s170 = smul.addr %s169, 8
        %s171 = scalar_lea.vmem [#allocation7], %s170
        %v172 = vld [vmem:[%s147] sm:$0xff]
        %v173 = vld [vmem:[#allocation5] sm:$0xff]
        %v174 = vadd.f32 %v172, %v173
        %175 = vst [vmem:[%s171] sm:$0xff] %v174
        %s176 = sand.u32 %s75, 1
        %s177 = scalar_lea.sflag [#allocation4], %s176
        %s178 = sand.u32 %s75, 1
        %s179 = smul.addr %s178, 8
        %s180 = scalar_lea.vmem [#allocation7], %s179
        // Predicated region
        $region37: #{tpu_custom_call.1} parent=27 // pred_check
          %p181 = pneg %p85
        $region38: #{tpu_custom_call.1} parent=27 // pred_check_branch
          %183 = sbr.rel (%p181) target = $region40
        $region39: #{tpu_custom_call.1} parent=27 // pred_region
          %s185 = ssub.s32 128, 128
          %186 = vsyncadd %s177, %s185
          %s187 = smul.addr %s20, 128
          %s188 = scalar_lea.hbm %s2, %s187
          %s190 = sshll.u32 %s180, 4
          %s191 = int_to_ptr.vmem [resolvable:$true] %s190
          %193 = dma.vmem_to_hbm [thread:$0]  %s191, 128, %s188, %s177
        $region40: #{tpu_custom_call.1} parent=27 // pred_fallthru
          _
      $region28: #{tpu_custom_call.1} parent=5 // pred_fallthru
        _
      %p194 = scmp.le.s32.totalorder 2, %s15
      // Predicated region
      $region41: #{tpu_custom_call.1} parent=5 // pred_check
        %p195 = pneg %p194
      $region42: #{tpu_custom_call.1} parent=5 // pred_check_branch
        %197 = sbr.rel (%p195) target = $region44
      $region43: #{tpu_custom_call.1} parent=5 // pred_region
        %s198 = ssub.s32 %s15, 2
        // Predicated region
        $region45: #{tpu_custom_call.1} parent=43 // pred_check
          %p199 = pneg %p91
        $region46: #{tpu_custom_call.1} parent=43 // pred_check_branch
          %201 = sbr.rel (%p199) target = $region48
        $region47: #{tpu_custom_call.1} parent=43 // pred_region
          %s202 = sand.u32 %s76, 1
          %s203 = scalar_lea.sflag [#allocation4], %s202
          %s204 = sand.u32 %s76, 1
          %s205 = smul.addr %s204, 8
          %s206 = scalar_lea.vmem [#allocation7], %s205
          %207 = dma.done %s203, 128
        $region48: #{tpu_custom_call.1} parent=43 // pred_fallthru
          _
      $region44: #{tpu_custom_call.1} parent=5 // pred_fallthru
        _
    $region6: #{tpu_custom_call.1} parent=1 // loop_footer
      %s19 = sadd.s32 1, %s15
    $region7: #{tpu_custom_call.1} parent=1 // loop_footer_branch
      %14 = sbr.rel target = $region3
    $region8: #{tpu_custom_call.1} parent=1 // loop_exit
      _
    %208 = vsyncpa [#allocation3], 1
    %s209 = scalar_lea.sflag [#allocation3], 1
    %210 = vsyncpa %s209, 1
    %211 = vsyncpa [#allocation6], 1
    %212 = vsyncpa [#allocation4], 1
    %s213 = scalar_lea.sflag [#allocation4], 1
    %214 = vsyncpa %s213, 1

</llo_original>
